<compile_context>
chip_gen: v5e
topology: v5e:2x2
jax: 0.10.0
libtpu: 0.0.40
codegen_flags: <defaults>
</compile_context>

<pallas_src>
import functools

import jax
import jax.numpy as jnp
from jax.experimental import pallas as pl
from jax.experimental.pallas import tpu as pltpu


_BN_EPS = 1e-5
_MAX_BATCH_TILE = 512                    # ~85% of HBM roofline, tiny VMEM need
_VMEM_LIMIT_BYTES = 32 * 1024 * 1024     # explicit; safe on v5e/v6e/v7x (64 MiB)


def _round_up(x, m):
    return (x + m - 1) // m * m


def _batch_tile(B):
    # Full-dim tile when small (escape hatch for the (8,128) rule), otherwise a
    # multiple-of-8 tile; partial last block handled by the cdiv grid.
    return B if B <= _MAX_BATCH_TILE else _MAX_BATCH_TILE


# ----------------------------- kernels --------------------------------------

def _cat_kernel(t_ref, f_ref, o_ref):
    # f_ref: (TB, D) tile of relation r; t_ref: (R,) in SMEM.
    # Output block (TB, D) at block index (b, r) == columns [r*D:(r+1)*D] of the
    # (B, R*D) result, i.e. torch.transpose(0,1).reshape(B,-1) done by the DMA.
    r = pl.program_id(1)
    o_ref[...] = f_ref[...] * t_ref[r]


def _add_kernel(t_ref, f_ref, o_ref):
    # Sum over relations; output block is the accumulator (relation axis is the
    # innermost "arbitrary" grid axis, so the block stays VMEM-resident).
    r = pl.program_id(1)

    @pl.when(r == 0)
    def _():
        o_ref[...] = jnp.zeros_like(o_ref)

    o_ref[...] += f_ref[...] * t_ref[r]


def _cat_mlp_kernel(t_ref, f_ref, w1_ref, b1_ref, w2_ref, b2_ref, o_ref,
                    acc_ref):
    # Fused: scale -> (implicit concat) -> Linear(H,H) -> BN(folded) -> ReLU ->
    # Dropout(eval=identity) -> Linear(H,O).
    # The concat over relations is a block-row split of W1:
    #   h = sum_r (f[r] * t[r]) @ W1[r*D:(r+1)*D, :]
    r = pl.program_id(1)

    @pl.when(r == 0)
    def _():
        acc_ref[...] = jnp.zeros_like(acc_ref)

    acc_ref[...] += jnp.dot(f_ref[...] * t_ref[r], w1_ref[...],
                            preferred_element_type=jnp.float32)

    @pl.when(r == pl.num_programs(1) - 1)
    def _():
        # TODO(synk): Dropout reproduced in eval mode (identity); training-mode
        # stochastic dropout is not reproduced here.
        h = jnp.maximum(acc_ref[...] + b1_ref[...], 0.0)
        o_ref[...] = (jnp.dot(h, w2_ref[...],
                              preferred_element_type=jnp.float32)
                      + b2_ref[...]).astype(o_ref.dtype)


# ----------------------------- wrappers --------------------------------------

def _cparams(dim_sems):
    return pltpu.CompilerParams(dimension_semantics=dim_sems,
                                vmem_limit_bytes=_VMEM_LIMIT_BYTES)


def _cat_call(features, t):
    R, B, D = features.shape
    TB = _batch_tile(B)
    nb = pl.cdiv(B, TB)
    return pl.pallas_call(
        _cat_kernel,
        out_shape=jax.ShapeDtypeStruct((B, R * D), features.dtype),
        grid=(nb, R),
        in_specs=[
            pl.BlockSpec(memory_space=pltpu.MemorySpace.SMEM),        # t (R,)
            pl.BlockSpec((None, TB, D), lambda b, r: (r, b, 0)),      # features
        ],
        out_specs=pl.BlockSpec((TB, D), lambda b, r: (b, r)),
        compiler_params=_cparams(("parallel", "parallel")),
    )(t, features)


def _add_call(features, t):
    R, B, D = features.shape
    TB = _batch_tile(B)
    nb = pl.cdiv(B, TB)
    return pl.pallas_call(
        _add_kernel,
        out_shape=jax.ShapeDtypeStruct((B, D), features.dtype),
        grid=(nb, R),
        in_specs=[
            pl.BlockSpec(memory_space=pltpu.MemorySpace.SMEM),
            pl.BlockSpec((None, TB, D), lambda b, r: (r, b, 0)),
        ],
        out_specs=pl.BlockSpec((TB, D), lambda b, r: (b, 0)),
        compiler_params=_cparams(("parallel", "arbitrary")),
    )(t, features)


def _fold_bn(w1, b1, gamma, beta, mean, var, eps=_BN_EPS):
    # Eval-mode BatchNorm folded into the preceding Linear (exact transform).
    scale = gamma * jax.lax.rsqrt(var + eps)        # (1, H)
    return w1 * scale, (b1 - mean) * scale + beta


def _cat_mlp_call(features, t, mlp_params):
    R, B, D = features.shape
    H = R * D
    w1, b1, gamma, beta, mean, var, w2, b2 = mlp_params
    w1f, b1f = _fold_bn(w1, b1, gamma, beta, mean, var)

    O = w2.shape[1]
    Opad = _round_up(O, 128)                        # lane-dense output stores
    if Opad != O:
        w2 = jnp.pad(w2, ((0, 0), (0, Opad - O)))
        b2 = jnp.pad(b2, ((0, 0), (0, Opad - O)))

    TB = _batch_tile(B)
    nb = pl.cdiv(B, TB)
    out = pl.pallas_call(
        _cat_mlp_kernel,
        out_shape=jax.ShapeDtypeStruct((B, Opad), features.dtype),
        grid=(nb, R),
        in_specs=[
            pl.BlockSpec(memory_space=pltpu.MemorySpace.SMEM),        # t (R,)
            pl.BlockSpec((None, TB, D), lambda b, r: (r, b, 0)),      # features
            pl.BlockSpec((D, H), lambda b, r: (r, 0)),                # W1 rows r
            pl.BlockSpec((1, H), lambda b, r: (0, 0)),                # b1 (folded)
            pl.BlockSpec((H, Opad), lambda b, r: (0, 0)),             # W2 (resident)
            pl.BlockSpec((1, Opad), lambda b, r: (0, 0)),             # b2
        ],
        out_specs=pl.BlockSpec((TB, Opad), lambda b, r: (b, 0)),
        scratch_shapes=[pltpu.VMEM((TB, H), jnp.float32)],
        compiler_params=_cparams(("parallel", "arbitrary")),
    )(t, features, w1f, b1f, w2, b2)
    return out[:, :O] if Opad != O else out


def inter_agg(features, thresholds, inter_opt, mlp_params=None):
    """Mirrors Inter_AGG.forward(features, thresholds, inter_opt)."""
    R = features.shape[0]
    t = thresholds.reshape(R).astype(features.dtype)
    ones = jnp.ones((R,), features.dtype)
    if inter_opt == 'cat_wo_avg':
        return _cat_call(features, ones)
    if inter_opt == 'cat_w_avg':
        return _cat_call(features, t)
    if inter_opt in ('cat_w_avg_mlp', 'cat_wo_avg_mlp'):
        # NOTE: the reference torch code multiplies by thresholds in BOTH mlp
        # branches; we preserve that quirk.
        return _cat_mlp_call(features, t, mlp_params)
    if inter_opt == 'add_wo_avg':
        return _add_call(features, ones)
    if inter_opt == 'add_w_avg':
        return _add_call(features, t)
    raise ValueError(f"unknown inter_opt: {inter_opt}")


# ----------------------------- demo / check ----------------------------------

if __name__ == "__main__":
    key = jax.random.PRNGKey(0)
    R, B, D = 2, 8, 128          # relations, batch, per-relation hidden
    H, O = R * D, 64             # mlp_args = (hid_dim, out_dim) = (256, 64)

    keys = jax.random.split(key, 10)
    features = jax.random.normal(keys[0], (R, B, D), jnp.float32)
    thresholds = jax.random.uniform(keys[1], (R, 1), jnp.float32)

    # Deterministic synthetic MLP / BatchNorm parameters (eval-mode BN stats,
    # non-trivial so the BN-folding path is actually exercised).
    w1 = 0.05 * jax.random.normal(keys[2], (H, H), jnp.float32)
    b1 = 0.05 * jax.random.normal(keys[3], (1, H), jnp.float32)
    gamma = 0.5 + jax.random.uniform(keys[4], (1, H), jnp.float32)
    beta = 0.1 * jax.random.normal(keys[5], (1, H), jnp.float32)
    mean = 0.1 * jax.random.normal(keys[6], (1, H), jnp.float32)
    var = 0.5 + jax.random.uniform(keys[7], (1, H), jnp.float32)
    w2 = 0.05 * jax.random.normal(keys[8], (H, O), jnp.float32)
    b2 = 0.05 * jax.random.normal(keys[9], (1, O), jnp.float32)
    mlp_params = (w1, b1, gamma, beta, mean, var, w2, b2)

    outs = {}
    for opt in ['cat_wo_avg', 'cat_w_avg', 'cat_w_avg_mlp',
                'cat_wo_avg_mlp', 'add_wo_avg', 'add_w_avg']:
        outs[opt] = inter_agg(features, thresholds, opt, mlp_params)
    jax.block_until_ready(outs)

    # plain-JAX references
    t3 = thresholds.reshape(R, 1, 1)
    cat_w_ref = jnp.transpose(features * t3, (1, 0, 2)).reshape(B, R * D)
    cat_wo_ref = jnp.transpose(features, (1, 0, 2)).reshape(B, R * D)
    add_w_ref = jnp.sum(features * t3, axis=0)
    add_wo_ref = jnp.sum(features, axis=0)
    h_ref = jnp.maximum((cat_w_ref @ w1 + b1 - mean) *
                        jax.lax.rsqrt(var + _BN_EPS) * gamma + beta, 0.0)
    mlp_ref = h_ref @ w2 + b2

    assert jnp.allclose(outs['cat_w_avg'], cat_w_ref, rtol=1e-5, atol=1e-5)
    assert jnp.allclose(outs['cat_wo_avg'], cat_wo_ref, rtol=1e-5, atol=1e-5)
    assert jnp.allclose(outs['add_w_avg'], add_w_ref, rtol=1e-5, atol=1e-5)
    assert jnp.allclose(outs['add_wo_avg'], add_wo_ref, rtol=1e-5, atol=1e-5)
    assert outs['cat_w_avg_mlp'].shape == (B, O)
    assert jnp.allclose(outs['cat_w_avg_mlp'], mlp_ref, rtol=5e-3, atol=5e-3)
    # both mlp branches apply thresholds (reference-code quirk, preserved)
    assert jnp.allclose(outs['cat_wo_avg_mlp'], outs['cat_w_avg_mlp'],
                        rtol=1e-6, atol=1e-6)

    print("KERNEL_OK")
</pallas_src>

<mosaic_0001>
module attributes {stable_mosaic.version = 11 : i64} {
  func.func @_cat_kernel(%arg0: i32, %arg1: i32, %arg2: memref<2xf32, #tpu.memory_space<smem>>, %arg3: memref<1x8x128xf32, #tpu.memory_space<vmem>>, %arg4: memref<8x128xf32, #tpu.memory_space<vmem>>) attributes {dimension_semantics = [#tpu.dimension_semantics<parallel>, #tpu.dimension_semantics<parallel>], iteration_bounds = array<i64: 1, 2>, scalar_prefetch = 0 : i64, scratch_operands = 0 : i64, tpu.core_type = #tpu.core_type<tc>, window_params = [{transform_indices = @transform_0, window_bounds = array<i64: 2>}, {transform_indices = @transform_1, window_bounds = array<i64: 1, 8, 128>}, {transform_indices = @transform_2, window_bounds = array<i64: 8, 128>}]} {
    %c0 = arith.constant 0 : index
    %c0_0 = arith.constant 0 : index
    %c0_1 = arith.constant 0 : index
    %0 = vector.load %arg3[%c0, %c0_0, %c0_1] : memref<1x8x128xf32, #tpu.memory_space<vmem>>, vector<1x8x128xf32>
    %1 = vector.shape_cast %0 : vector<1x8x128xf32> to vector<8x128xf32>
    %2 = arith.index_cast %arg1 : i32 to index
    %3 = memref.load %arg2[%2] : memref<2xf32, #tpu.memory_space<smem>>
    %4 = vector.broadcast %3 : f32 to vector<8x128xf32>
    %5 = arith.mulf %1, %4 : vector<8x128xf32>
    %c0_2 = arith.constant 0 : index
    %c0_3 = arith.constant 0 : index
    %6 = vector.load %arg4[%c0_2, %c0_3] : memref<8x128xf32, #tpu.memory_space<vmem>>, vector<8x128xf32>
    tpu.vector_store %arg4[%c0_2, %c0_3], %5 {strides = array<i32>} : memref<8x128xf32, #tpu.memory_space<vmem>>, vector<8x128xf32>,
    return
  }
  func.func @transform_0(%arg0: i32, %arg1: i32) -> i32 {
    %c0_i32 = arith.constant 0 : i32
    %c0_i32_0 = arith.constant 0 : i32
    return %c0_i32 : i32
  }
  func.func @transform_1(%arg0: i32, %arg1: i32) -> (i32, i32, i32) {
    %c0_i32 = arith.constant 0 : i32
    %c0_i32_0 = arith.constant 0 : i32
    return %arg1, %arg0, %c0_i32 : i32, i32, i32
  }
  func.func @transform_2(%arg0: i32, %arg1: i32) -> (i32, i32) {
    %c0_i32 = arith.constant 0 : i32
    return %arg0, %arg1 : i32, i32
  }
}

</mosaic_0001>

<llo_original>
// kernel: tpu_custom_call.1
$region0: #{tpu_custom_call.1}
  #allocation0 [shape = 'u32[]', space=smem, size = 0x4, offset = 0x4, fixed_abs, tag = 'smem constant byte address 0x4 - core index']
  #allocation1 [shape = 'u32[72,128]{1,0:T(1,128)}', space=vmem, size = 0x9000, scoped, tag = 'internal scratch']
  %s0 = inlined_call_operand.hbm [shape: f32[2], index: 0, kind: input, shape index: {}]
  %s1 = inlined_call_operand.hbm [shape: f32[2,8,128], index: 1, kind: input, shape index: {}]
  %s2 = inlined_call_operand.hbm [shape: f32[8,256], index: 2, kind: output, shape index: {}]
  %s3 = sld [smem:[#allocation0]]
  $region49: #{tpu_custom_call.1} parent=0
    _
  %s5 = ssub.s32 1, %s3
  %s6 = scalar_select 0, %s5, %s3
  $region1: #{tpu_custom_call.1} parent=0
    #allocation2 [shape = 'u8[512]{0}', space=smem, size = 0x200, scoped, tag = 'input window, operand 0, single buffered']
    #allocation3 [shape = 's32[2]{0}', space=sflag, size = 0x8, scoped, tag = 'scoped memory for tpu_custom_call.1']
    #allocation4 [shape = 's32[2]{0}', space=sflag, size = 0x8, scoped, tag = 'scoped memory for tpu_custom_call.1']
    #allocation5 [shape = 's32[2]{0}', space=sflag, size = 0x8, scoped, tag = 'scoped memory for tpu_custom_call.1']
    #allocation6 [shape = 'u8[8192]{0}', space=vmem, size = 0x2000, scoped, tag = 'input window, operand 1']
    #allocation7 [shape = 'u8[8192]{0}', space=vmem, size = 0x2000, scoped, tag = 'output window, operand 0']
    %7 = vsyncpa [#allocation5], 0
    %8 = vsyncpa [#allocation3], 0
    %s9 = scalar_lea.sflag [#allocation3], 1
    %10 = vsyncpa %s9, 0
    %11 = vsyncpa [#allocation4], 0
    %s12 = scalar_lea.sflag [#allocation4], 1
    %13 = vsyncpa %s12, 0
    loop: start=0, step=1, limit=4
    $region2: #{tpu_custom_call.1} parent=1 // loop_pre_header
      _
    $region3: #{tpu_custom_call.1} parent=1 // loop_header
      %s15 = sphi 0, %s19
      %p16 = scmp.ge.s32.totalorder %s15, 4
      %s22 = sphi 0, %s34
      %s23 = sphi 0, %s30
      %s24 = sphi 0, %s22
      %s25 = sphi 0, %s23
      %s26 = sphi 0, %s24
      %s27 = sphi 0, %s25
      %s35 = sphi 0, %s35
      %s37 = sphi 0, %s35
      %s38 = sphi 0, %s37
      %s52 = sphi 0, %s38
      %s60 = sphi 0, %s62
      %s63 = sphi 0, %s60
      %s64 = sphi 0, %s63
      %s80 = sphi 0, %s64
      %s88 = sphi 0, %s90
      %s91 = sphi 0, %s88
      %s92 = sphi 0, %s91
      %s108 = sphi 0, %s92
    $region4: #{tpu_custom_call.1} parent=1 // loop_header_branch
      %18 = sbr.rel (%p16) target = $region8
    $region5: #{tpu_custom_call.1} parent=1 // loop_body
      %s20 = ssub.s32 %s15, 1
      %s21 = ssub.s32 %s15, 2
      %s28 = sadd.s32 1, %s23
      %p29 = scmp.ge.s32.totalorder %s28, 2
      %s30 = scalar_select %p29, 0, %s28
      %s31 = sadd.s32 1, %s22
      %s32 = scalar_select %p29, %s31, %s22
      %p33 = scmp.ge.s32.totalorder %s32, 1
      %s34 = scalar_select %p33, 0, %s32
      %s36 = sadd.s32 %s35, 1
      %p39 = scmp.eq.s32.totalorder %s15, 1
      %p40 = scmp.ne.s32.totalorder %s35, %s37
      %p41 = scmp.eq.s32.totalorder %s15, 0
      %p42 = por %p40, %p41
      %p43 = scmp.ne.s32.totalorder %s35, %s37
      %p44 = scmp.eq.s32.totalorder %s20, 1
      %p45 = por %p43, %p44
      %p46 = scmp.ne.s32.totalorder %s37, %s38
      %p47 = scmp.eq.s32.totalorder %s20, 0
      %p48 = por %p46, %p47
      %p49 = scmp.ne.s32.totalorder %s37, %s38
      %p50 = scmp.eq.s32.totalorder %s21, 1
      %p51 = por %p49, %p50
      %p53 = scmp.ne.s32.totalorder %s38, %s52
      %p54 = scmp.eq.s32.totalorder %s21, 0
      %p55 = por %p53, %p54
      %s56 = ssub.s32 %s23, %s30
      %s57 = ssub.s32 %s22, %s34
      %s58 = sor.u32 %s56, %s57
      %p59 = scmp.eq.s32.totalorder %s58, 0
      %s61 = sadd.s32 %s60, 1
      %s62 = scalar_select %p59, %s60, %s61
      %p65 = pneg %p59
      %p66 = scmp.eq.s32.totalorder %s15, 1
      %p67 = por %p65, %p66
      %p68 = scmp.ne.s32.totalorder %s60, %s63
      %p69 = scmp.eq.s32.totalorder %s15, 0
      %p70 = por %p68, %p69
      %p71 = scmp.ne.s32.totalorder %s60, %s63
      %p72 = scmp.eq.s32.totalorder %s20, 1
      %p73 = por %p71, %p72
      %p74 = scmp.ne.s32.totalorder %s63, %s64
      %p75 = scmp.eq.s32.totalorder %s20, 0
      %p76 = por %p74, %p75
      %p77 = scmp.ne.s32.totalorder %s63, %s64
      %p78 = scmp.eq.s32.totalorder %s21, 1
      %p79 = por %p77, %p78
      %p81 = scmp.ne.s32.totalorder %s64, %s80
      %p82 = scmp.eq.s32.totalorder %s21, 0
      %p83 = por %p81, %p82
      %s84 = ssub.s32 %s22, %s34
      %s85 = ssub.s32 %s23, %s30
      %s86 = sor.u32 %s84, %s85
      %p87 = scmp.eq.s32.totalorder %s86, 0
      %s89 = sadd.s32 %s88, 1
      %s90 = scalar_select %p87, %s88, %s89
      %p93 = pneg %p87
      %p94 = scmp.eq.s32.totalorder %s15, 1
      %p95 = por %p93, %p94
      %p96 = scmp.ne.s32.totalorder %s88, %s91
      %p97 = scmp.eq.s32.totalorder %s15, 0
      %p98 = por %p96, %p97
      %p99 = scmp.ne.s32.totalorder %s88, %s91
      %p100 = scmp.eq.s32.totalorder %s20, 1
      %p101 = por %p99, %p100
      %p102 = scmp.ne.s32.totalorder %s91, %s92
      %p103 = scmp.eq.s32.totalorder %s20, 0
      %p104 = por %p102, %p103
      %p105 = scmp.ne.s32.totalorder %s91, %s92
      %p106 = scmp.eq.s32.totalorder %s21, 1
      %p107 = por %p105, %p106
      %p109 = scmp.ne.s32.totalorder %s92, %s108
      %p110 = scmp.eq.s32.totalorder %s21, 0
      %p111 = por %p109, %p110
      %p112 = scmp.le.s32.totalorder 1, %s15
      %p113 = scmp.lt.s32.totalorder %s15, 3
      %p114 = pnand %p112, %p113
      %p115 = pneg %p114
      // Predicated region
      $region9: #{tpu_custom_call.1} parent=5 // pred_check
        _
      $region10: #{tpu_custom_call.1} parent=5 // pred_check_branch
        %117 = sbr.rel (%p114) target = $region12
      $region11: #{tpu_custom_call.1} parent=5 // pred_region
        %s118 = ssub.s32 %s15, 1
        // Predicated region
        $region13: #{tpu_custom_call.1} parent=11 // pred_check
          %p119 = pneg %p48
        $region14: #{tpu_custom_call.1} parent=11 // pred_check_branch
          %121 = sbr.rel (%p119) target = $region16
        $region15: #{tpu_custom_call.1} parent=11 // pred_region
          %123 = vsyncadd [#allocation5], 0
          %s125 = sshll.u32 %s0, 4
          %s126 = int_to_ptr.hbm [resolvable:$true] %s125
          %128 = dma.hbm_to_smem %s126, 16, [#allocation2], [#allocation5]
        $region16: #{tpu_custom_call.1} parent=11 // pred_fallthru
          _
      $region12: #{tpu_custom_call.1} parent=5 // pred_fallthru
        _
      %p129 = scmp.lt.s32.totalorder %s15, 2
      // Predicated region
      $region17: #{tpu_custom_call.1} parent=5 // pred_check
        %p130 = pneg %p129
      $region18: #{tpu_custom_call.1} parent=5 // pred_check_branch
        %132 = sbr.rel (%p130) target = $region20
      $region19: #{tpu_custom_call.1} parent=5 // pred_region
        // Predicated region
        $region21: #{tpu_custom_call.1} parent=19 // pred_check
          %p133 = pneg %p70
        $region22: #{tpu_custom_call.1} parent=19 // pred_check_branch
          %135 = sbr.rel (%p133) target = $region24
        $region23: #{tpu_custom_call.1} parent=19 // pred_region
          %s136 = sand.u32 %s60, 1
          %s137 = scalar_lea.sflag [#allocation3], %s136
          %s138 = sand.u32 %s60, 1
          %s139 = smul.addr %s138, 8
          %s140 = scalar_lea.vmem [#allocation6], %s139
          %142 = vsyncadd %s137, 0
          %s143 = sadd.s32 %s22, %s23
          %s144 = smul.addr %s143, 8
          %s145 = scalar_lea.hbm %s1, %s144
          %s147 = sshll.u32 %s145, 4
          %s148 = int_to_ptr.hbm [resolvable:$true] %s147
          %s149 = sshll.u32 %s140, 4
          %s150 = int_to_ptr.vmem [resolvable:$true] %s149
          %152 = dma.hbm_to_vmem [thread:$0]  %s148, 128, %s150, %s137
        $region24: #{tpu_custom_call.1} parent=19 // pred_fallthru
          _
      $region20: #{tpu_custom_call.1} parent=5 // pred_fallthru
        _
      %p153 = scmp.le.s32.totalorder 1, %s15
      %p154 = scmp.lt.s32.totalorder %s15, 3
      %p155 = pnand %p153, %p154
      %p156 = pneg %p155
      // Predicated region
      $region25: #{tpu_custom_call.1} parent=5 // pred_check
        _
      $region26: #{tpu_custom_call.1} parent=5 // pred_check_branch
        %158 = sbr.rel (%p155) target = $region28
      $region27: #{tpu_custom_call.1} parent=5 // pred_region
        %s159 = ssub.s32 %s15, 1
        // Predicated region
        $region29: #{tpu_custom_call.1} parent=27 // pred_check
          %p160 = pneg %p48
        $region30: #{tpu_custom_call.1} parent=27 // pred_check_branch
          %162 = sbr.rel (%p160) target = $region32
        $region31: #{tpu_custom_call.1} parent=27 // pred_region
          %164 = dma.done [#allocation5], 16
        $region32: #{tpu_custom_call.1} parent=27 // pred_fallthru
          _
        %s165 = sand.u32 %s63, 1
        %s166 = scalar_lea.sflag [#allocation3], %s165
        %s167 = sand.u32 %s63, 1
        %s168 = smul.addr %s167, 8
        %s169 = scalar_lea.vmem [#allocation6], %s168
        // Predicated region
        $region33: #{tpu_custom_call.1} parent=27 // pred_check
          %p170 = pneg %p76
        $region34: #{tpu_custom_call.1} parent=27 // pred_check_branch
          %172 = sbr.rel (%p170) target = $region36
        $region35: #{tpu_custom_call.1} parent=27 // pred_region
          %174 = dma.done %s166, 128
        $region36: #{tpu_custom_call.1} parent=27 // pred_fallthru
          _
        %175 = sfence
        %p176 = pneg %p48
        %p177 = pneg %p45
        %s178 = sand.u32 %s63, 1
        %s179 = scalar_lea.sflag [#allocation3], %s178
        %s180 = sand.u32 %s63, 1
        %s181 = smul.addr %s180, 8
        %s182 = scalar_lea.vmem [#allocation6], %s181
        %p183 = pneg %p76
        %p184 = pneg %p73
        %p185 = pneg %p104
        %p186 = pneg %p101
        %s187 = sand.u32 %s91, 1
        %s188 = scalar_lea.sflag [#allocation4], %s187
        %s189 = sand.u32 %s91, 1
        %s190 = smul.addr %s189, 8
        %s191 = scalar_lea.vmem [#allocation7], %s190
        %v192 = vld [vmem:[%s169] sm:$0xff]
        %s193 = sld [smem:[#allocation2 + %s25]]
        %v194 = vstv %s193
        %v195 = vmul.f32 %v192, %v194
        %196 = vst [vmem:[%s191] sm:$0xff] %v195
        %s197 = sand.u32 %s91, 1
        %s198 = scalar_lea.sflag [#allocation4], %s197
        %s199 = sand.u32 %s91, 1
        %s200 = smul.addr %s199, 8
        %s201 = scalar_lea.vmem [#allocation7], %s200
        // Predicated region
        $region37: #{tpu_custom_call.1} parent=27 // pred_check
          %p202 = pneg %p101
        $region38: #{tpu_custom_call.1} parent=27 // pred_check_branch
          %204 = sbr.rel (%p202) target = $region40
        $region39: #{tpu_custom_call.1} parent=27 // pred_region
          %206 = vsyncadd %s198, 0
          %s207 = smul.addr %s24, 2
          %s208 = sadd.s32 %s25, %s207
          %s209 = smul.addr %s208, 8
          %s210 = scalar_lea.hbm %s2, %s209
          %s212 = sshll.u32 %s201, 4
          %s213 = int_to_ptr.vmem [resolvable:$true] %s212
          %s214 = sshll.u32 %s210, 4
          %s215 = int_to_ptr.hbm [resolvable:$true] %s214
          %217 = dma.vmem_to_hbm [thread:$0]  %s213, 128, %s215, %s198
        $region40: #{tpu_custom_call.1} parent=27 // pred_fallthru
          _
      $region28: #{tpu_custom_call.1} parent=5 // pred_fallthru
        _
      %p218 = scmp.le.s32.totalorder 2, %s15
      // Predicated region
      $region41: #{tpu_custom_call.1} parent=5 // pred_check
        %p219 = pneg %p218
      $region42: #{tpu_custom_call.1} parent=5 // pred_check_branch
        %221 = sbr.rel (%p219) target = $region44
      $region43: #{tpu_custom_call.1} parent=5 // pred_region
        %s222 = ssub.s32 %s15, 2
        // Predicated region
        $region45: #{tpu_custom_call.1} parent=43 // pred_check
          %p223 = pneg %p107
        $region46: #{tpu_custom_call.1} parent=43 // pred_check_branch
          %225 = sbr.rel (%p223) target = $region48
        $region47: #{tpu_custom_call.1} parent=43 // pred_region
          %s226 = sand.u32 %s92, 1
          %s227 = scalar_lea.sflag [#allocation4], %s226
          %s228 = sand.u32 %s92, 1
          %s229 = smul.addr %s228, 8
          %s230 = scalar_lea.vmem [#allocation7], %s229
          %232 = dma.done %s227, 128
        $region48: #{tpu_custom_call.1} parent=43 // pred_fallthru
          _
      $region44: #{tpu_custom_call.1} parent=5 // pred_fallthru
        _
    $region6: #{tpu_custom_call.1} parent=1 // loop_footer
      %s19 = sadd.s32 1, %s15
    $region7: #{tpu_custom_call.1} parent=1 // loop_footer_branch
      %14 = sbr.rel target = $region3
    $region8: #{tpu_custom_call.1} parent=1 // loop_exit
      _
    %233 = vsyncpa [#allocation3], 1
    %s234 = scalar_lea.sflag [#allocation3], 1
    %235 = vsyncpa %s234, 1
    %236 = vsyncpa [#allocation4], 1
    %s237 = scalar_lea.sflag [#allocation4], 1
    %238 = vsyncpa %s237, 1
    %239 = vsyncpa [#allocation5], 1
    %s240 = scalar_lea.sflag [#allocation5], 1
    %241 = vsyncpa %s240, 1

</llo_original>
